<compile_context>
chip_gen: v7x
topology: tpu7x:2x2x1
jax: 0.10.0
libtpu: 0.0.40
codegen_flags: <defaults>
</compile_context>

<pallas_src>
import jax
import jax.numpy as jnp
import numpy as np
from jax import lax
from jax.experimental import pallas as pl
from jax.experimental.pallas import tpu as pltpu


# ----------------------------------------------------------------------------
# Pallas kernel: per-tile partial sum of squares (ragged tail masked in-kernel).
# Input tile : (tile_rows, P)
# Output tile: (1, sub, 128) if P % 128 == 0 else (1, sub, P)
# ----------------------------------------------------------------------------
def _make_sumsq_kernel(n_rows, p, tile_rows, num_tiles, sub, lane_fold):
    groups = tile_rows // sub
    ragged = (n_rows % tile_rows) != 0
    valid_last = n_rows - (num_tiles - 1) * tile_rows  # valid rows in the last tile

    def partial_sum(x):
        # x: (tile_rows, p) float32. Regrouping is (sub, 128)-tile aligned -> no XLU.
        if lane_fold:
            xr = x.reshape(groups, sub, p // 128, 128)
            return jnp.sum(xr * xr, axis=(0, 2))[None]        # (1, sub, 128)
        xr = x.reshape(groups, sub, p)
        return jnp.sum(xr * xr, axis=0, keepdims=True)        # (1, sub, p)

    def kernel(x_ref, out_ref):
        x = x_ref[...].astype(jnp.float32)
        if not ragged:
            out_ref[...] = partial_sum(x)
        else:
            is_last = pl.program_id(0) == num_tiles - 1

            @pl.when(is_last)
            def _():
                # Edge block: rows past n_rows hold unspecified data -> zero-mask
                # before squaring (zeros contribute nothing to the sum).
                row_ids = lax.broadcasted_iota(jnp.int32, (tile_rows, p), 0)
                out_ref[...] = partial_sum(jnp.where(row_ids < valid_last, x, 0.0))

            @pl.when(jnp.logical_not(is_last))
            def _():
                out_ref[...] = partial_sum(x)

    return kernel


def pallas_sum_squares(x2d, *, target_block_bytes=4 << 20,
                       min_pallas_bytes=1 << 20,
                       vmem_limit_bytes=32 << 20):
    """sum(x**2) over a 2-D array, streamed through a Pallas TPU kernel.

    No wrapper-side padding: ragged row counts are masked inside the kernel and
    non-128-multiple lane counts use a full-extent lane block.
    """
    n_rows, p = (int(d) for d in x2d.shape)
    itemsize = jnp.dtype(x2d.dtype).itemsize
    total_bytes = n_rows * p * itemsize

    # Small-input fallback: a loss head this small should not pay kernel-dispatch cost.
    if total_bytes < min_pallas_bytes:
        xf = x2d.astype(jnp.float32)
        return jnp.sum(xf * xf)

    # Native packed-tile sublane count per dtype (f32:8, bf16:16, int8/fp8:32).
    sub = {4: 8, 2: 16, 1: 32}.get(itemsize, 8)
    lane_fold = (p % 128 == 0)
    lane_out = 128 if lane_fold else p

    # Row tile: ~target_block_bytes per block, multiple of `sub`, and capped so there
    # are >= 2 grid steps whenever possible (lets v7x's two TCs both stream rows).
    bytes_per_row = max(p * itemsize, 1)
    rows_for_target = max(sub, (target_block_bytes // bytes_per_row) // sub * sub)
    half_rows = ((-(-n_rows // 2)) + sub - 1) // sub * sub   # ceil(n/2) rounded to sub
    tile_rows = int(max(sub, min(rows_for_target, half_rows)))
    num_tiles = -(-n_rows // tile_rows)

    kernel = _make_sumsq_kernel(n_rows, p, tile_rows, num_tiles, sub, lane_fold)
    out_bytes = num_tiles * sub * lane_out * 4

    partials = pl.pallas_call(
        kernel,
        out_shape=jax.ShapeDtypeStruct((num_tiles, sub, lane_out), jnp.float32),
        grid=(num_tiles,),
        in_specs=[pl.BlockSpec((tile_rows, p), lambda i: (i, 0))],
        out_specs=pl.BlockSpec((1, sub, lane_out), lambda i: (i, 0, 0)),
        compiler_params=pltpu.CompilerParams(
            dimension_semantics=("parallel",),
            vmem_limit_bytes=vmem_limit_bytes),
        cost_estimate=pl.CostEstimate(
            flops=2 * n_rows * p,
            transcendentals=0,
            bytes_accessed=total_bytes + out_bytes),
    )(x2d)

    # Tiny final reduction (num_tiles * sub * lane_out elements) — fuses in XLA with
    # the matched-row correction and the weight regularizer.
    return jnp.sum(partials)


# ----------------------------------------------------------------------------
# Glue: deterministic matcher + SetCriterion.forward equivalent.
# ----------------------------------------------------------------------------
def simple_matcher(outputs, targets):
    # Deterministic stand-in for the Hungarian matcher: target j of batch i is
    # matched to query (Q - 1 - j).  Produces unique (batch, src) pairs, which the
    # sum-of-squares decomposition relies on (as would any real Hungarian matching).
    # TODO(synk): the real HungarianMatcher is a separate module; plug it in here.
    Q = outputs['pred_occ'].shape[1]
    indices = []
    for t in targets['occ']:
        n = t.shape[0]
        src = (Q - 1 - jnp.arange(n)).astype(jnp.int32)
        tgt = jnp.arange(n, dtype=jnp.int32)
        indices.append((src, tgt))
    return indices


def set_criterion_forward(outputs, targets, matcher=simple_matcher,
                          min_pallas_bytes=1 << 20):
    indices = matcher(outputs, targets)
    pred_occ = outputs['pred_occ']
    B, Q, P = pred_occ.shape

    # _get_src_permutation_idx
    batch_idx = jnp.concatenate(
        [jnp.full_like(src, i) for i, (src, _) in enumerate(indices)])
    src_idx = jnp.concatenate([src for src, _ in indices])
    target_occ_o = jnp.concatenate(
        [t[J] for t, (_, J) in zip(targets['occ'], indices)],
        axis=0).astype(jnp.float32)

    # Hot path: sum(pred^2) over the full (B*Q, P) prediction — Pallas kernel.
    sum_pred_sq = pallas_sum_squares(pred_occ.reshape(B * Q, P),
                                     min_pallas_bytes=min_pallas_bytes)

    # Tiny matched-row correction (a handful of rows): sum(tgt^2 - 2*pred*tgt).
    pred_m = pred_occ[batch_idx, src_idx].astype(jnp.float32)
    correction = jnp.sum(target_occ_o * target_occ_o - 2.0 * pred_m * target_occ_o)

    mse = (sum_pred_sq + correction) / float(B * Q * P)

    # O(1 KB) one-shot weight regularizer — plain JAX (fuses with the epilogue).
    cw2 = outputs['binary_weights'].astype(jnp.float32)
    cw3 = outputs['merge_weights'].astype(jnp.float32)
    loss_w = (jnp.sum(jnp.abs(cw3 - 1.0))
              + jnp.sum(jnp.maximum(cw2 - 1.0, 0.0) - jnp.minimum(cw2, 0.0)))

    loss_total = mse + loss_w
    return {'loss_occ': {'shape_occ': mse}, 'loss': loss_total}


# ----------------------------------------------------------------------------
# Main
# ----------------------------------------------------------------------------
if __name__ == "__main__":
    key = jax.random.PRNGKey(0)
    kp, kw2, kw3, kt0, kt1, ks1, ks2 = jax.random.split(key, 7)

    B, Q, P = 2, 8, 128          # batch, queries (room slots), sampled points
    CW2_SHAPE = (64, 16)         # binary_weights  (planes x convexes)
    CW3_SHAPE = (16, 8)          # merge_weights

    outputs = {
        'pred_occ': jax.random.normal(kp, (B, Q, P), dtype=jnp.float32),
        'binary_weights': jax.random.uniform(kw2, CW2_SHAPE, dtype=jnp.float32,
                                             minval=-0.5, maxval=1.5),
        'merge_weights': jax.random.uniform(kw3, CW3_SHAPE, dtype=jnp.float32,
                                            minval=0.0, maxval=2.0),
    }
    # Per-batch variable number of GT rooms, occupancy in {0,1}.
    targets = {
        'occ': [
            jax.random.bernoulli(kt0, 0.5, (3, P)).astype(jnp.float32),
            jax.random.bernoulli(kt1, 0.5, (5, P)).astype(jnp.float32),
        ]
    }

    # min_pallas_bytes=0 forces the Pallas path even at this small demo size.
    loss = set_criterion_forward(outputs, targets, min_pallas_bytes=0)
    jax.block_until_ready(loss['loss'])

    # Pure-JAX reference (same semantics as the PyTorch module: scatter + MSE).
    indices = simple_matcher(outputs, targets)
    batch_idx = jnp.concatenate(
        [jnp.full_like(src, i) for i, (src, _) in enumerate(indices)])
    src_idx = jnp.concatenate([src for src, _ in indices])
    tgt_o = jnp.concatenate(
        [t[J] for t, (_, J) in zip(targets['occ'], indices)], axis=0)
    tgt = jnp.zeros((B, Q, P), jnp.float32).at[batch_idx, src_idx].set(tgt_o)
    ref_mse = jnp.mean((tgt - outputs['pred_occ']) ** 2)
    cw2, cw3 = outputs['binary_weights'], outputs['merge_weights']
    ref_w = (jnp.sum(jnp.abs(cw3 - 1.0))
             + jnp.sum(jnp.maximum(cw2 - 1.0, 0.0) - jnp.minimum(cw2, 0.0)))
    ref_loss = ref_mse + ref_w

    np.testing.assert_allclose(np.asarray(loss['loss_occ']['shape_occ']),
                               np.asarray(ref_mse), rtol=1e-5, atol=1e-5)
    np.testing.assert_allclose(np.asarray(loss['loss']),
                               np.asarray(ref_loss), rtol=1e-5, atol=1e-5)

    # Extra kernel self-tests: ragged row count + non-128 lane count (masked tail path)
    # and bf16 native (16,128) packing with lane-folded partials.
    xr = jax.random.normal(ks1, (37, 200), dtype=jnp.float32)
    np.testing.assert_allclose(
        np.asarray(pallas_sum_squares(xr, min_pallas_bytes=0)),
        np.asarray(jnp.sum(xr * xr)), rtol=1e-5, atol=1e-3)

    xb = jax.random.normal(ks2, (37, 256), dtype=jnp.float32).astype(jnp.bfloat16)
    ref_b = jnp.sum(xb.astype(jnp.float32) ** 2)
    np.testing.assert_allclose(
        np.asarray(pallas_sum_squares(xb, min_pallas_bytes=0)),
        np.asarray(ref_b), rtol=1e-4, atol=1e-2)

    print("KERNEL_OK")
</pallas_src>

<mosaic_0001>
module attributes {stable_mosaic.version = 11 : i64} {
  func.func @kernel(%arg0: i32, %arg1: memref<8x128xf32, #tpu.memory_space<vmem>>, %arg2: memref<1x8x128xf32, #tpu.memory_space<vmem>>) attributes {dimension_semantics = [#tpu.dimension_semantics<parallel>], iteration_bounds = array<i64: 2>, scalar_prefetch = 0 : i64, scratch_operands = 0 : i64, tpu.core_type = #tpu.core_type<tc>, window_params = [{transform_indices = @transform_0, window_bounds = array<i64: 8, 128>}, {transform_indices = @transform_1, window_bounds = array<i64: 1, 8, 128>}]} {
    %c0 = arith.constant 0 : index
    %c0_0 = arith.constant 0 : index
    %0 = vector.load %arg1[%c0, %c0_0] : memref<8x128xf32, #tpu.memory_space<vmem>>, vector<8x128xf32>
    %1 = vector.shape_cast %0 : vector<8x128xf32> to vector<1x8x1x128xf32>
    %2 = arith.mulf %1, %1 : vector<1x8x1x128xf32>
    %cst = arith.constant dense<0.000000e+00> : vector<8x128xf32>
    %3 = vector.multi_reduction <add>, %2, %cst [0, 2] : vector<1x8x1x128xf32> to vector<8x128xf32>
    %4 = vector.shape_cast %3 : vector<8x128xf32> to vector<1x8x128xf32>
    %c0_1 = arith.constant 0 : index
    %c0_2 = arith.constant 0 : index
    %c0_3 = arith.constant 0 : index
    %5 = vector.load %arg2[%c0_1, %c0_2, %c0_3] : memref<1x8x128xf32, #tpu.memory_space<vmem>>, vector<1x8x128xf32>
    tpu.vector_store %arg2[%c0_1, %c0_2, %c0_3], %4 {strides = array<i32>} : memref<1x8x128xf32, #tpu.memory_space<vmem>>, vector<1x8x128xf32>,
    return
  }
  func.func @transform_0(%arg0: i32) -> (i32, i32) {
    %c0_i32 = arith.constant 0 : i32
    %c0_i32_0 = arith.constant 0 : i32
    return %arg0, %c0_i32 : i32, i32
  }
  func.func @transform_1(%arg0: i32) -> (i32, i32, i32) {
    %c0_i32 = arith.constant 0 : i32
    %c0_i32_0 = arith.constant 0 : i32
    %c0_i32_1 = arith.constant 0 : i32
    return %arg0, %c0_i32, %c0_i32_0 : i32, i32, i32
  }
}

</mosaic_0001>

<llo_original>
// kernel: tpu_custom_call.1
$region0: #{tpu_custom_call.1}
  #allocation0 [shape = 'u32[]', space=smem, size = 0x4, offset = 0x4, fixed_abs, tag = 'smem constant byte address 0x4 - core index']
  #allocation1 [shape = 'u32[144,128]{1,0:T(1,128)}', space=vmem, size = 0x12000, scoped, tag = 'internal scratch']
  %s0 = inlined_call_operand.hbm [shape: f32[16,128], index: 0, kind: input, shape index: {}]
  %s1 = inlined_call_operand.hbm [shape: f32[2,8,128], index: 1, kind: output, shape index: {}]
  %s2 = sld [smem:[#allocation0]]
  $region41: #{tpu_custom_call.1} parent=0
    _
  %s4 = ssub.s32 1, %s2
  %s5 = scalar_select 0, %s4, %s2
  $region1: #{tpu_custom_call.1} parent=0
    #allocation2 [shape = 'u8[8192]{0}', space=vmem, size = 0x2000, scoped, tag = 'input window, operand 0']
    #allocation3 [shape = 's32[2]{0}', space=sflag, size = 0x8, scoped, tag = 'scoped memory for tpu_custom_call.1']
    #allocation4 [shape = 's32[2]{0}', space=sflag, size = 0x8, scoped, tag = 'scoped memory for tpu_custom_call.1']
    #allocation5 [shape = 'u8[8192]{0}', space=vmem, size = 0x2000, scoped, tag = 'output window, operand 0']
    %6 = vsyncpa [#allocation3], 0
    %s7 = scalar_lea.sflag [#allocation3], 1
    %8 = vsyncpa %s7, 0
    %9 = vsyncpa [#allocation4], 0
    %s10 = scalar_lea.sflag [#allocation4], 1
    %11 = vsyncpa %s10, 0
    loop: start=0, step=1, limit=4
    $region2: #{tpu_custom_call.1} parent=1 // loop_pre_header
      _
    $region3: #{tpu_custom_call.1} parent=1 // loop_header
      %s13 = sphi 0, %s17
      %p14 = scmp.ge.s32.totalorder %s13, 4
      %s23 = sphi 0, %s25
      %s26 = sphi 0, %s23
      %s27 = sphi 0, %s26
      %s43 = sphi 0, %s27
      %s49 = sphi 0, %s51
      %s52 = sphi 0, %s49
      %s53 = sphi 0, %s52
      %s69 = sphi 0, %s53
    $region4: #{tpu_custom_call.1} parent=1 // loop_header_branch
      %16 = sbr.rel (%p14) target = $region8
    $region5: #{tpu_custom_call.1} parent=1 // loop_body
      %s18 = ssub.s32 %s13, 1
      %s19 = ssub.s32 %s13, 2
      %s20 = sadd.s32 %s13, 1
      %s21 = ssub.s32 %s13, %s20
      %p22 = scmp.eq.s32.totalorder %s21, 0
      %s24 = sadd.s32 %s23, 1
      %s25 = scalar_select %p22, %s23, %s24
      %p28 = pneg %p22
      %p29 = scmp.eq.s32.totalorder %s13, 1
      %p30 = por %p28, %p29
      %p31 = scmp.ne.s32.totalorder %s23, %s26
      %p32 = scmp.eq.s32.totalorder %s13, 0
      %p33 = por %p31, %p32
      %p34 = scmp.ne.s32.totalorder %s23, %s26
      %p35 = scmp.eq.s32.totalorder %s18, 1
      %p36 = por %p34, %p35
      %p37 = scmp.ne.s32.totalorder %s26, %s27
      %p38 = scmp.eq.s32.totalorder %s18, 0
      %p39 = por %p37, %p38
      %p40 = scmp.ne.s32.totalorder %s26, %s27
      %p41 = scmp.eq.s32.totalorder %s19, 1
      %p42 = por %p40, %p41
      %p44 = scmp.ne.s32.totalorder %s27, %s43
      %p45 = scmp.eq.s32.totalorder %s19, 0
      %p46 = por %p44, %p45
      %s47 = ssub.s32 %s13, %s20
      %p48 = scmp.eq.s32.totalorder %s47, 0
      %s50 = sadd.s32 %s49, 1
      %s51 = scalar_select %p48, %s49, %s50
      %p54 = pneg %p48
      %p55 = scmp.eq.s32.totalorder %s13, 1
      %p56 = por %p54, %p55
      %p57 = scmp.ne.s32.totalorder %s49, %s52
      %p58 = scmp.eq.s32.totalorder %s13, 0
      %p59 = por %p57, %p58
      %p60 = scmp.ne.s32.totalorder %s49, %s52
      %p61 = scmp.eq.s32.totalorder %s18, 1
      %p62 = por %p60, %p61
      %p63 = scmp.ne.s32.totalorder %s52, %s53
      %p64 = scmp.eq.s32.totalorder %s18, 0
      %p65 = por %p63, %p64
      %p66 = scmp.ne.s32.totalorder %s52, %s53
      %p67 = scmp.eq.s32.totalorder %s19, 1
      %p68 = por %p66, %p67
      %p70 = scmp.ne.s32.totalorder %s53, %s69
      %p71 = scmp.eq.s32.totalorder %s19, 0
      %p72 = por %p70, %p71
      %p73 = scmp.le.s32.totalorder 1, %s13
      %p74 = scmp.lt.s32.totalorder %s13, 3
      %p75 = pnand %p73, %p74
      %p76 = pneg %p75
      // Predicated region
      $region9: #{tpu_custom_call.1} parent=5 // pred_check
        _
      $region10: #{tpu_custom_call.1} parent=5 // pred_check_branch
        %78 = sbr.rel (%p75) target = $region12
      $region11: #{tpu_custom_call.1} parent=5 // pred_region
        %s79 = ssub.s32 %s13, 1
      $region12: #{tpu_custom_call.1} parent=5 // pred_fallthru
        _
      %p80 = scmp.lt.s32.totalorder %s13, 2
      // Predicated region
      $region13: #{tpu_custom_call.1} parent=5 // pred_check
        %p81 = pneg %p80
      $region14: #{tpu_custom_call.1} parent=5 // pred_check_branch
        %83 = sbr.rel (%p81) target = $region16
      $region15: #{tpu_custom_call.1} parent=5 // pred_region
        // Predicated region
        $region17: #{tpu_custom_call.1} parent=15 // pred_check
          %p84 = pneg %p33
        $region18: #{tpu_custom_call.1} parent=15 // pred_check_branch
          %86 = sbr.rel (%p84) target = $region20
        $region19: #{tpu_custom_call.1} parent=15 // pred_region
          %s87 = sand.u32 %s23, 1
          %s88 = scalar_lea.sflag [#allocation3], %s87
          %s89 = sand.u32 %s23, 1
          %s90 = smul.addr %s89, 8
          %s91 = scalar_lea.vmem [#allocation2], %s90
          %s93 = ssub.s32 128, 128
          %94 = vsyncadd %s88, %s93
          %s95 = smul.addr %s13, 128
          %s96 = scalar_lea.hbm %s0, %s95
          %s98 = sshll.u32 %s91, 4
          %s99 = int_to_ptr.vmem [resolvable:$true] %s98
          %101 = dma.hbm_to_vmem [thread:$0]  %s96, 128, %s99, %s88
        $region20: #{tpu_custom_call.1} parent=15 // pred_fallthru
          _
      $region16: #{tpu_custom_call.1} parent=5 // pred_fallthru
        _
      %p102 = scmp.le.s32.totalorder 1, %s13
      %p103 = scmp.lt.s32.totalorder %s13, 3
      %p104 = pnand %p102, %p103
      %p105 = pneg %p104
      // Predicated region
      $region21: #{tpu_custom_call.1} parent=5 // pred_check
        _
      $region22: #{tpu_custom_call.1} parent=5 // pred_check_branch
        %107 = sbr.rel (%p104) target = $region24
      $region23: #{tpu_custom_call.1} parent=5 // pred_region
        %s108 = ssub.s32 %s13, 1
        %s109 = sand.u32 %s26, 1
        %s110 = scalar_lea.sflag [#allocation3], %s109
        %s111 = sand.u32 %s26, 1
        %s112 = smul.addr %s111, 8
        %s113 = scalar_lea.vmem [#allocation2], %s112
        // Predicated region
        $region25: #{tpu_custom_call.1} parent=23 // pred_check
          %p114 = pneg %p39
        $region26: #{tpu_custom_call.1} parent=23 // pred_check_branch
          %116 = sbr.rel (%p114) target = $region28
        $region27: #{tpu_custom_call.1} parent=23 // pred_region
          %117 = dma.done %s110, 128
        $region28: #{tpu_custom_call.1} parent=23 // pred_fallthru
          _
        %s118 = sand.u32 %s26, 1
        %s119 = scalar_lea.sflag [#allocation3], %s118
        %s120 = sand.u32 %s26, 1
        %s121 = smul.addr %s120, 8
        %s122 = scalar_lea.vmem [#allocation2], %s121
        %p123 = pneg %p39
        %p124 = pneg %p36
        %p125 = pneg %p65
        %p126 = pneg %p62
        %s127 = sand.u32 %s52, 1
        %s128 = scalar_lea.sflag [#allocation4], %s127
        %s129 = sand.u32 %s52, 1
        %s130 = smul.addr %s129, 8
        %s131 = scalar_lea.vmem [#allocation5], %s130
        %v132 = vld [vmem:[%s113] sm:$0xff]
        %v134 = vcombine.high %v132, %v132
        %v136 = vunpack.c.l.s4 1966171168
        %v137 = vunpack.c.0.s8 %v136
        %v138 = vlaneseq
        %v139 = vshrl.u32 %v138, 7
        %v140 = vsub.s32 %v137, %v139
        %v141 = vrot.slane %v132, %v140
        %v143 = vunpack.c.l.s4 1966171168
        %v144 = vunpack.c.0.s8 %v143
        %v145 = vlaneseq
        %v146 = vshrl.u32 %v145, 7
        %v147 = vsub.s32 %v144, %v146
        %v148 = vrot.slane %v134, %v147
        %v149 = vcombine.high %v141, %v141
        %v150 = vcombine.high %v148, %v148
        %v152 = vunpack.c.l.s4 1966171168
        %v153 = vunpack.c.0.s8 %v152
        %v154 = vlaneseq
        %v155 = vshrl.u32 %v154, 7
        %v156 = vsub.s32 %v153, %v155
        %v157 = vrot.slane %v141, %v156
        %v159 = vunpack.c.l.s4 1966171168
        %v160 = vunpack.c.0.s8 %v159
        %v161 = vlaneseq
        %v162 = vshrl.u32 %v161, 7
        %v163 = vsub.s32 %v160, %v162
        %v164 = vrot.slane %v148, %v163
        %v166 = vunpack.c.l.s4 1966171168
        %v167 = vunpack.c.0.s8 %v166
        %v168 = vlaneseq
        %v169 = vshrl.u32 %v168, 7
        %v170 = vsub.s32 %v167, %v169
        %v171 = vrot.slane %v149, %v170
        %v173 = vunpack.c.l.s4 1966171168
        %v174 = vunpack.c.0.s8 %v173
        %v175 = vlaneseq
        %v176 = vshrl.u32 %v175, 7
        %v177 = vsub.s32 %v174, %v176
        %v178 = vrot.slane %v150, %v177
        %v179 = vcombine.high %v157, %v157
        %v180 = vcombine.high %v164, %v164
        %v181 = vcombine.high %v171, %v171
        %v182 = vcombine.high %v178, %v178
        %v191 = vmul.f32 %v157, %v157
        %v192 = vmul.f32 %v171, %v171
        %v193 = vmul.f32 %v179, %v179
        %v194 = vmul.f32 %v181, %v181
        %v195 = vmul.f32 %v164, %v164
        %v196 = vmul.f32 %v178, %v178
        %v197 = vmul.f32 %v180, %v180
        %v198 = vmul.f32 %v182, %v182
        %v199 = vadd.f32 %v191, 0.0
        %v200 = vadd.f32 %v192, 0.0
        %v201 = vadd.f32 %v193, 0.0
        %v202 = vadd.f32 %v194, 0.0
        %v203 = vadd.f32 %v195, 0.0
        %v204 = vadd.f32 %v196, 0.0
        %v205 = vadd.f32 %v197, 0.0
        %v206 = vadd.f32 %v198, 0.0
        %v215 = vcombine.low %v199, %v200
        %v216 = vcombine.low %v201, %v202
        %v217 = vcombine.low %v203, %v204
        %v218 = vcombine.low %v205, %v206
        %v220 = vunpack.c.l.s4 1966171168
        %v221 = vunpack.c.0.s8 %v220
        %v222 = vlaneseq
        %v223 = vshrl.u32 %v222, 7
        %v224 = vsub.s32 %v221, %v223
        %v225 = vrot.slane %v215, %v224
        %v227 = vunpack.c.l.s4 1966171168
        %v228 = vunpack.c.0.s8 %v227
        %v229 = vlaneseq
        %v230 = vshrl.u32 %v229, 7
        %v231 = vsub.s32 %v228, %v230
        %v232 = vrot.slane %v216, %v231
        %v234 = vunpack.c.l.s4 1966171168
        %v235 = vunpack.c.0.s8 %v234
        %v236 = vlaneseq
        %v237 = vshrl.u32 %v236, 7
        %v238 = vsub.s32 %v235, %v237
        %v239 = vrot.slane %v217, %v238
        %v241 = vunpack.c.l.s4 1966171168
        %v242 = vunpack.c.0.s8 %v241
        %v243 = vlaneseq
        %v244 = vshrl.u32 %v243, 7
        %v245 = vsub.s32 %v242, %v244
        %v246 = vrot.slane %v218, %v245
        %v247 = vcombine.low %v225, %v232
        %v248 = vcombine.low %v239, %v246
        %v250 = vunpack.c.l.s4 1966171168
        %v251 = vunpack.c.0.s8 %v250
        %v252 = vlaneseq
        %v253 = vshrl.u32 %v252, 7
        %v254 = vsub.s32 %v251, %v253
        %v255 = vrot.slane %v247, %v254
        %v257 = vunpack.c.l.s4 1966171168
        %v258 = vunpack.c.0.s8 %v257
        %v259 = vlaneseq
        %v260 = vshrl.u32 %v259, 7
        %v261 = vsub.s32 %v258, %v260
        %v262 = vrot.slane %v248, %v261
        %v263 = vcombine.low %v255, %v262
        %265 = vst [vmem:[%s131] sm:$0xff] %v263
        %s266 = sand.u32 %s52, 1
        %s267 = scalar_lea.sflag [#allocation4], %s266
        %s268 = sand.u32 %s52, 1
        %s269 = smul.addr %s268, 8
        %s270 = scalar_lea.vmem [#allocation5], %s269
        // Predicated region
        $region29: #{tpu_custom_call.1} parent=23 // pred_check
          %p271 = pneg %p62
        $region30: #{tpu_custom_call.1} parent=23 // pred_check_branch
          %273 = sbr.rel (%p271) target = $region32
        $region31: #{tpu_custom_call.1} parent=23 // pred_region
          %s275 = ssub.s32 128, 128
          %276 = vsyncadd %s267, %s275
          %s277 = smul.addr %s18, 128
          %s278 = scalar_lea.hbm %s1, %s277
          %s280 = sshll.u32 %s270, 4
          %s281 = int_to_ptr.vmem [resolvable:$true] %s280
          %283 = dma.vmem_to_hbm [thread:$0]  %s281, 128, %s278, %s267
        $region32: #{tpu_custom_call.1} parent=23 // pred_fallthru
          _
      $region24: #{tpu_custom_call.1} parent=5 // pred_fallthru
        _
      %p284 = scmp.le.s32.totalorder 2, %s13
      // Predicated region
      $region33: #{tpu_custom_call.1} parent=5 // pred_check
        %p285 = pneg %p284
      $region34: #{tpu_custom_call.1} parent=5 // pred_check_branch
        %287 = sbr.rel (%p285) target = $region36
      $region35: #{tpu_custom_call.1} parent=5 // pred_region
        %s288 = ssub.s32 %s13, 2
        // Predicated region
        $region37: #{tpu_custom_call.1} parent=35 // pred_check
          %p289 = pneg %p68
        $region38: #{tpu_custom_call.1} parent=35 // pred_check_branch
          %291 = sbr.rel (%p289) target = $region40
        $region39: #{tpu_custom_call.1} parent=35 // pred_region
          %s292 = sand.u32 %s53, 1
          %s293 = scalar_lea.sflag [#allocation4], %s292
          %s294 = sand.u32 %s53, 1
          %s295 = smul.addr %s294, 8
          %s296 = scalar_lea.vmem [#allocation5], %s295
          %297 = dma.done %s293, 128
        $region40: #{tpu_custom_call.1} parent=35 // pred_fallthru
          _
      $region36: #{tpu_custom_call.1} parent=5 // pred_fallthru
        _
    $region6: #{tpu_custom_call.1} parent=1 // loop_footer
      %s17 = sadd.s32 1, %s13
    $region7: #{tpu_custom_call.1} parent=1 // loop_footer_branch
      %12 = sbr.rel target = $region3
    $region8: #{tpu_custom_call.1} parent=1 // loop_exit
      _
    %298 = vsyncpa [#allocation3], 1
    %s299 = scalar_lea.sflag [#allocation3], 1
    %300 = vsyncpa %s299, 1
    %301 = vsyncpa [#allocation4], 1
    %s302 = scalar_lea.sflag [#allocation4], 1
    %303 = vsyncpa %s302, 1

</llo_original>
